<compile_context>
chip_gen: v7x
topology: tpu7x:2x2x1
jax: 0.10.0
libtpu: 0.0.40
codegen_flags: <defaults>
</compile_context>

<pallas_src>
import math
import functools

import jax
import jax.numpy as jnp
from jax.experimental import pallas as pl
from jax.experimental.pallas import tpu as pltpu


# ------------------------------- kernel --------------------------------------

def _mlp_kernel(x_ref, w1_ref, b1_ref, w2_ref, b2_ref, o_ref, acc_ref, *,
                gelu_in_bf16):
    # x_ref:  (tm, D)  compute dtype (bf16 or f32)
    # w1_ref: (D, th)  compute dtype    b1_ref: (1, th) f32
    # w2_ref: (th, D)  compute dtype    b2_ref: (1, D)  f32
    # o_ref:  (tm, D)  output dtype
    # acc_ref:(tm, D)  f32 accumulator, resident across the hidden-chunk axis
    h_idx = pl.program_id(1)

    # Initialize the accumulator with the broadcast output bias: removes a full
    # (tm, D) f32 add + broadcast from the finalize branch.
    @pl.when(h_idx == 0)
    def _():
        acc_ref[...] = jnp.broadcast_to(b2_ref[...], acc_ref.shape)

    # First linear for this hidden chunk: (tm, D) @ (D, th) + b1, f32 accumulate.
    h = jnp.dot(x_ref[...], w1_ref[...],
                preferred_element_type=jnp.float32) + b1_ref[...]

    # GELU, tanh approximation (matches nn.GELU(approximate='tanh')).
    # bf16 polynomial on chips with bf16 VPU/EUP (halves VALU issue count);
    # f32 on v5e (no bf16 VPU -> bf16 would only add casts).
    c = 0.7978845608028654  # sqrt(2/pi)
    if gelu_in_bf16:
        hb = h.astype(jnp.bfloat16)
        g = 0.5 * hb * (1.0 + jnp.tanh(c * (hb + 0.044715 * hb * hb * hb)))
    else:
        g = 0.5 * h * (1.0 + jnp.tanh(c * (h + 0.044715 * h * h * h)))

    # Second linear, accumulated over hidden chunks: (tm, th) @ (th, D).
    acc_ref[...] += jnp.dot(g.astype(w2_ref.dtype), w2_ref[...],
                            preferred_element_type=jnp.float32)

    @pl.when(h_idx == pl.num_programs(1) - 1)
    def _():
        o_ref[...] = acc_ref[...].astype(o_ref.dtype)


# ----------------------------- host helpers ----------------------------------

def _round_up(x, m):
    return ((x + m - 1) // m) * m


def _device_info():
    """(vmem_capacity_bytes, tensorcores_per_chip, has_bf16_vpu) — best effort."""
    vmem_cap, num_tc, bf16_vpu = 64 << 20, 1, False  # conservative default
    kind = ""
    try:
        kind = jax.devices()[0].device_kind.lower()
    except Exception:
        pass
    if "v7" in kind:
        vmem_cap, num_tc, bf16_vpu = 64 << 20, 2, True
    elif "v6" in kind:
        vmem_cap, num_tc, bf16_vpu = 128 << 20, 1, True
    elif "v5" in kind:
        # v5e / v5p: 128 MiB VMEM, no bf16 VPU/EUP.
        vmem_cap, num_tc, bf16_vpu = 128 << 20, 1, False
    else:
        try:  # unknown generation: query capacity, stay conservative otherwise
            vmem_cap = int(pltpu.get_tpu_info().vmem_capacity_bytes)
        except Exception:
            pass
    return vmem_cap, num_tc, bf16_vpu


def _estimate_vmem_bytes(tm, th, D, H, in_isz, out_isz):
    """Scoped-VMEM estimate: double-buffered tiles + scratch + live intermediates."""
    return (2 * tm * D * in_isz       # x tile
            + 2 * D * th * in_isz     # W1 tile
            + 2 * th * 4              # b1 tile
            + 2 * th * D * in_isz     # W2 tile
            + 2 * D * 4               # b2
            + 2 * tm * D * out_isz    # output tile
            + tm * D * 4              # f32 accumulator scratch
            + tm * th * 4             # live f32 pre-GELU intermediate
            + tm * th * in_isz)       # GELU output cast for second matmul


def _select_tiles(M, D, H, in_isz, out_isz, tm_req, budget, num_tc, align):
    """Pick (tm, th). Priority: largest tm (arithmetic intensity), then the
    largest th — preferring th == H (weight-resident, weights DMA'd once)."""
    tm = _round_up(min(tm_req, _round_up(M, align)), align)

    # v7x: guarantee >=2 blocks on the "parallel" row axis so both TCs work.
    if num_tc >= 2:
        while _round_up(M, tm) // tm < 2 and tm > align:
            nxt = max(align, _round_up(tm // 2, align))
            if nxt == tm:
                break
            tm = nxt

    # Hidden-chunk candidates: full H first (weight resident), then lane-aligned
    # divisors of H, largest first.
    th_cands = [H] + [c for c in (1024, 512, 384, 256, 128)
                      if c < H and H % c == 0]

    while True:
        for th in th_cands:
            if _estimate_vmem_bytes(tm, th, D, H, in_isz, out_isz) <= budget:
                return tm, th
        nxt = max(align, _round_up(tm // 2, align))
        if nxt == tm:
            return tm, th_cands[-1]   # nothing fits cleanly: smallest config
        tm = nxt


# ------------------------------- wrapper --------------------------------------

@functools.partial(jax.jit, static_argnames=("tm", "compute_dtype"))
def mlp_forward(x, w1, b1, w2, b2, *, tm=512, compute_dtype=jnp.bfloat16):
    """x: (B, T, D).  w1: (D, 4D), b1: (4D,), w2: (4D, D), b2: (D,).

    Weights are stored as (in, out), i.e. the transpose of nn.Linear.weight.
    Returns (B, T, D) in x's dtype.
    """
    B, T, D = x.shape
    H = w1.shape[1]
    M = B * T
    out_dtype = x.dtype

    in_isz = jnp.dtype(compute_dtype).itemsize
    out_isz = jnp.dtype(out_dtype).itemsize
    align = 16 if in_isz < 4 else 8          # bf16 packs 16 rows per sublane tile

    vmem_cap, num_tc, bf16_vpu = _device_info()
    # ~100 MiB on 128-MiB chips (v5e/v6e), ~50 MiB on v7x's 64 MiB per TC.
    budget = min(int(vmem_cap * 0.78), 100 * 1024 * 1024)

    tm_sel, th = _select_tiles(M, D, H, in_isz, out_isz, tm, budget, num_tc, align)
    tm = tm_sel
    M_pad = _round_up(M, tm)

    x2d = x.reshape(M, D)
    if M_pad != M:
        x2d = jnp.pad(x2d, ((0, M_pad - M), (0, 0)))

    # bf16 (or f32) MXU operands, f32 biases / accumulation.
    x2d = x2d.astype(compute_dtype)
    w1c = w1.astype(compute_dtype)
    w2c = w2.astype(compute_dtype)
    b1_2d = b1.reshape(1, H).astype(jnp.float32)
    b2_2d = b2.reshape(1, D).astype(jnp.float32)

    grid = (M_pad // tm, H // th)
    n_row_blocks = grid[0]
    weight_resident = (th == H)

    gelu_in_bf16 = bool(bf16_vpu) and (jnp.dtype(compute_dtype) == jnp.dtype(jnp.bfloat16))
    kernel = functools.partial(_mlp_kernel, gelu_in_bf16=gelu_in_bf16)

    # Advisory cost estimate for XLA's scheduler around the custom call.
    weight_bytes = 2 * D * H * in_isz * (1 if weight_resident else n_row_blocks)
    cost = pl.CostEstimate(
        flops=int(4 * M_pad * D * H),
        transcendentals=int(M_pad * H),
        bytes_accessed=int(M_pad * D * (in_isz + out_isz) + weight_bytes
                           + 4 * (H + D)),
    )

    out2d = pl.pallas_call(
        kernel,
        out_shape=jax.ShapeDtypeStruct((M_pad, D), out_dtype),
        grid_spec=pltpu.PrefetchScalarGridSpec(
            num_scalar_prefetch=0,
            grid=grid,
            in_specs=[
                pl.BlockSpec((tm, D), lambda i, h: (i, 0)),   # x rows
                pl.BlockSpec((D, th), lambda i, h: (0, h)),   # W1 hidden chunk
                pl.BlockSpec((1, th), lambda i, h: (0, h)),   # b1 hidden chunk
                pl.BlockSpec((th, D), lambda i, h: (h, 0)),   # W2 hidden chunk
                pl.BlockSpec((1, D), lambda i, h: (0, 0)),    # b2
            ],
            out_specs=pl.BlockSpec((tm, D), lambda i, h: (i, 0)),
            scratch_shapes=[pltpu.VMEM((tm, D), jnp.float32)],
        ),
        compiler_params=pltpu.CompilerParams(
            dimension_semantics=("parallel", "arbitrary"),
            vmem_limit_bytes=int(budget)),
        cost_estimate=cost,
    )(x2d, w1c, b1_2d, w2c, b2_2d)

    return out2d[:M].reshape(B, T, D)


# ------------------------------ reference -------------------------------------

def _reference(x, w1, b1, w2, b2):
    h = x @ w1 + b1
    c = math.sqrt(2.0 / math.pi)
    h = 0.5 * h * (1.0 + jnp.tanh(c * (h + 0.044715 * h ** 3)))
    return h @ w2 + b2


if __name__ == "__main__":
    # Config implied by the module: n_embd -> 4*n_embd -> n_embd
    B, T, n_embd = 2, 8, 32
    hidden = 4 * n_embd  # 128

    key = jax.random.PRNGKey(0)
    kx, k1, kb1, k2, kb2 = jax.random.split(key, 5)

    x = jax.random.normal(kx, (B, T, n_embd), dtype=jnp.float32)

    # Deterministic parameter init (uniform like nn.Linear default), stored as (in, out).
    bound1 = 1.0 / math.sqrt(n_embd)
    w1 = jax.random.uniform(k1, (n_embd, hidden), jnp.float32, -bound1, bound1)
    b1 = jax.random.uniform(kb1, (hidden,), jnp.float32, -bound1, bound1)

    bound2 = 1.0 / math.sqrt(hidden)
    w2 = jax.random.uniform(k2, (hidden, n_embd), jnp.float32, -bound2, bound2)
    b2 = jax.random.uniform(kb2, (n_embd,), jnp.float32, -bound2, bound2)

    ref = _reference(x, w1, b1, w2, b2)

    # Exact (f32 MXU operand) path — tight tolerance.
    out_f32 = jax.block_until_ready(
        mlp_forward(x, w1, b1, w2, b2, compute_dtype=jnp.float32))
    assert out_f32.shape == (B, T, n_embd)
    assert jnp.allclose(out_f32, ref, atol=1e-5, rtol=1e-5), "f32 mismatch vs reference"

    # Default fast path: bf16 MXU operands, f32 accumulation — loose tolerance.
    out_bf16 = jax.block_until_ready(mlp_forward(x, w1, b1, w2, b2))
    assert out_bf16.shape == (B, T, n_embd)
    assert jnp.allclose(out_bf16, ref, atol=5e-2, rtol=5e-2), "bf16 mismatch vs reference"

    # Non-divisible token count — exercises row padding + slice-off path.
    x_odd = jax.random.normal(jax.random.PRNGKey(1), (1, 13, n_embd), jnp.float32)
    ref_odd = _reference(x_odd, w1, b1, w2, b2)
    out_odd = jax.block_until_ready(
        mlp_forward(x_odd, w1, b1, w2, b2, compute_dtype=jnp.float32))
    assert out_odd.shape == (1, 13, n_embd)
    assert jnp.allclose(out_odd, ref_odd, atol=1e-5, rtol=1e-5), "padded-M mismatch"

    print("KERNEL_OK")
</pallas_src>

<mosaic_0001>
module attributes {stable_mosaic.version = 11 : i64} {
  func.func @_mlp_kernel(%arg0: i32, %arg1: i32, %arg2: memref<16x32xf32, #tpu.memory_space<vmem>>, %arg3: memref<32x128xf32, #tpu.memory_space<vmem>>, %arg4: memref<1x128xf32, #tpu.memory_space<vmem>>, %arg5: memref<128x32xf32, #tpu.memory_space<vmem>>, %arg6: memref<1x32xf32, #tpu.memory_space<vmem>>, %arg7: memref<16x32xf32, #tpu.memory_space<vmem>>, %arg8: memref<16x32xf32, #tpu.memory_space<vmem>>) attributes {dimension_semantics = [#tpu.dimension_semantics<parallel>, #tpu.dimension_semantics<arbitrary>], iteration_bounds = array<i64: 1, 1>, scalar_prefetch = 0 : i64, scratch_operands = 1 : i64, tpu.core_type = #tpu.core_type<tc>, window_params = [{transform_indices = @transform_0, window_bounds = array<i64: 16, 32>}, {transform_indices = @transform_1, window_bounds = array<i64: 32, 128>}, {transform_indices = @transform_2, window_bounds = array<i64: 1, 128>}, {transform_indices = @transform_3, window_bounds = array<i64: 128, 32>}, {pipeline_mode = #tpu.pipeline_mode<synchronous>, transform_indices = @transform_4, window_bounds = array<i64: 1, 32>}, {transform_indices = @transform_5, window_bounds = array<i64: 16, 32>}]} {
    %c0_i32 = arith.constant 0 : i32
    %0 = arith.cmpi eq, %arg1, %c0_i32 : i32
    %1 = arith.extui %0 : i1 to i32
    %c0_i32_0 = arith.constant 0 : i32
    %2 = arith.cmpi ne, %1, %c0_i32_0 : i32
    scf.if %2 {
      %c0_19 = arith.constant 0 : index
      %c0_20 = arith.constant 0 : index
      %30 = vector.load %arg6[%c0_19, %c0_20] : memref<1x32xf32, #tpu.memory_space<vmem>>, vector<1x32xf32>
      %31 = vector.shape_cast %30 : vector<1x32xf32> to vector<1x32xf32>
      %32 = vector.broadcast %31 : vector<1x32xf32> to vector<16x32xf32>
      %c0_21 = arith.constant 0 : index
      %c0_22 = arith.constant 0 : index
      %33 = vector.load %arg8[%c0_21, %c0_22] : memref<16x32xf32, #tpu.memory_space<vmem>>, vector<16x32xf32>
      tpu.vector_store %arg8[%c0_21, %c0_22], %32 {strides = array<i32>} : memref<16x32xf32, #tpu.memory_space<vmem>>, vector<16x32xf32>,
    } else {
    }
    %c0 = arith.constant 0 : index
    %c0_1 = arith.constant 0 : index
    %3 = vector.load %arg2[%c0, %c0_1] : memref<16x32xf32, #tpu.memory_space<vmem>>, vector<16x32xf32>
    %c0_2 = arith.constant 0 : index
    %c0_3 = arith.constant 0 : index
    %4 = vector.load %arg3[%c0_2, %c0_3] : memref<32x128xf32, #tpu.memory_space<vmem>>, vector<32x128xf32>
    %cst = arith.constant dense<0.000000e+00> : vector<16x128xf32>
    %5 = tpu.matmul %3, %4, %cst {dimension_numbers = #tpu.dot_dimension_numbers<[1], [0], [0], [1], [0, 0, 1, 1], [], []>} : vector<16x32xf32>, vector<32x128xf32>, vector<16x128xf32> -> vector<16x128xf32>
    %c0_4 = arith.constant 0 : index
    %c0_5 = arith.constant 0 : index
    %6 = vector.load %arg4[%c0_4, %c0_5] : memref<1x128xf32, #tpu.memory_space<vmem>>, vector<1x128xf32>
    %7 = vector.broadcast %6 : vector<1x128xf32> to vector<16x128xf32>
    %8 = arith.addf %5, %7 : vector<16x128xf32>
    %cst_6 = arith.constant 5.000000e-01 : f32
    %9 = vector.broadcast %cst_6 : f32 to vector<16x128xf32>
    %10 = arith.mulf %9, %8 : vector<16x128xf32>
    %cst_7 = arith.constant 4.471500e-02 : f32
    %11 = vector.broadcast %cst_7 : f32 to vector<16x128xf32>
    %12 = arith.mulf %11, %8 : vector<16x128xf32>
    %13 = arith.mulf %12, %8 : vector<16x128xf32>
    %14 = arith.mulf %13, %8 : vector<16x128xf32>
    %15 = arith.addf %8, %14 : vector<16x128xf32>
    %cst_8 = arith.constant 0.797884583 : f32
    %16 = vector.broadcast %cst_8 : f32 to vector<16x128xf32>
    %17 = arith.mulf %16, %15 : vector<16x128xf32>
    %18 = math.tanh %17 : vector<16x128xf32>
    %cst_9 = arith.constant 1.000000e+00 : f32
    %19 = vector.broadcast %cst_9 : f32 to vector<16x128xf32>
    %20 = arith.addf %19, %18 : vector<16x128xf32>
    %21 = arith.mulf %10, %20 : vector<16x128xf32>
    %c0_10 = arith.constant 0 : index
    %c0_11 = arith.constant 0 : index
    %22 = vector.load %arg8[%c0_10, %c0_11] : memref<16x32xf32, #tpu.memory_space<vmem>>, vector<16x32xf32>
    %c0_12 = arith.constant 0 : index
    %c0_13 = arith.constant 0 : index
    %23 = vector.load %arg5[%c0_12, %c0_13] : memref<128x32xf32, #tpu.memory_space<vmem>>, vector<128x32xf32>
    %cst_14 = arith.constant dense<0.000000e+00> : vector<16x32xf32>
    %24 = tpu.matmul %21, %23, %cst_14 {dimension_numbers = #tpu.dot_dimension_numbers<[1], [0], [0], [1], [0, 0, 1, 1], [], []>} : vector<16x128xf32>, vector<128x32xf32>, vector<16x32xf32> -> vector<16x32xf32>
    %25 = arith.addf %22, %24 : vector<16x32xf32>
    %c0_15 = arith.constant 0 : index
    %c0_16 = arith.constant 0 : index
    %26 = vector.load %arg8[%c0_15, %c0_16] : memref<16x32xf32, #tpu.memory_space<vmem>>, vector<16x32xf32>
    tpu.vector_store %arg8[%c0_15, %c0_16], %25 {strides = array<i32>} : memref<16x32xf32, #tpu.memory_space<vmem>>, vector<16x32xf32>,
    %c0_i32_17 = arith.constant 0 : i32
    %27 = arith.cmpi eq, %arg1, %c0_i32_17 : i32
    %28 = arith.extui %27 : i1 to i32
    %c0_i32_18 = arith.constant 0 : i32
    %29 = arith.cmpi ne, %28, %c0_i32_18 : i32
    scf.if %29 {
      %c0_19 = arith.constant 0 : index
      %c0_20 = arith.constant 0 : index
      %30 = vector.load %arg8[%c0_19, %c0_20] : memref<16x32xf32, #tpu.memory_space<vmem>>, vector<16x32xf32>
      %c0_21 = arith.constant 0 : index
      %c0_22 = arith.constant 0 : index
      %31 = vector.load %arg7[%c0_21, %c0_22] : memref<16x32xf32, #tpu.memory_space<vmem>>, vector<16x32xf32>
      tpu.vector_store %arg7[%c0_21, %c0_22], %30 {strides = array<i32>} : memref<16x32xf32, #tpu.memory_space<vmem>>, vector<16x32xf32>,
    } else {
    }
    return
  }
  func.func @transform_0(%arg0: i32, %arg1: i32) -> (i32, i32) {
    %c0_i32 = arith.constant 0 : i32
    %c0_i32_0 = arith.constant 0 : i32
    return %arg0, %c0_i32 : i32, i32
  }
  func.func @transform_1(%arg0: i32, %arg1: i32) -> (i32, i32) {
    %c0_i32 = arith.constant 0 : i32
    %c0_i32_0 = arith.constant 0 : i32
    return %c0_i32, %arg1 : i32, i32
  }
  func.func @transform_2(%arg0: i32, %arg1: i32) -> (i32, i32) {
    %c0_i32 = arith.constant 0 : i32
    %c0_i32_0 = arith.constant 0 : i32
    return %c0_i32, %arg1 : i32, i32
  }
  func.func @transform_3(%arg0: i32, %arg1: i32) -> (i32, i32) {
    %c0_i32 = arith.constant 0 : i32
    %c0_i32_0 = arith.constant 0 : i32
    return %arg1, %c0_i32 : i32, i32
  }
  func.func @transform_4(%arg0: i32, %arg1: i32) -> (i32, i32) {
    %c0_i32 = arith.constant 0 : i32
    %c0_i32_0 = arith.constant 0 : i32
    %c0_i32_1 = arith.constant 0 : i32
    return %c0_i32, %c0_i32_0 : i32, i32
  }
  func.func @transform_5(%arg0: i32, %arg1: i32) -> (i32, i32) {
    %c0_i32 = arith.constant 0 : i32
    %c0_i32_0 = arith.constant 0 : i32
    return %arg0, %c0_i32 : i32, i32
  }
}

</mosaic_0001>

<llo_original>
// kernel: mlp_forward.1
$region0: #{mlp_forward.1}
  #allocation0 [shape = 'u32[]', space=smem, size = 0x4, offset = 0x4, fixed_abs, tag = 'smem constant byte address 0x4 - core index']
  #allocation1 [shape = 'u32[144,128]{1,0:T(1,128)}', space=vmem, size = 0x12000, scoped, tag = 'internal scratch']
  #allocation2 [shape = 'f32[16,32]{1,0:T(8,128)}', space=vmem, size = 0x2000, scoped, tag = 'scratch operand']
  %s0 = inlined_call_operand.vmem [shape: f32[16,32], index: 0, kind: input, shape index: {}]
  %s1 = inlined_call_operand.vmem [shape: f32[32,128], index: 1, kind: input, shape index: {}]
  %s2 = inlined_call_operand.vmem [shape: f32[1,128], index: 2, kind: input, shape index: {}]
  %s3 = inlined_call_operand.vmem [shape: f32[128,32], index: 3, kind: input, shape index: {}]
  %s4 = inlined_call_operand.vmem [shape: f32[1,32], index: 4, kind: input, shape index: {}]
  %s5 = inlined_call_operand.hbm [shape: f32[16,32], index: 5, kind: output, shape index: {}]
  %s6 = sld [smem:[#allocation0]]
  $region38: #{mlp_forward.1} parent=0
    _
  %s8 = ssub.s32 1, %s6
  %s9 = scalar_select 0, %s8, %s6
  $region1: #{mlp_forward.1} parent=0
    #allocation3 [shape = 'u8[8192]{0}', space=vmem, size = 0x2000, scoped, tag = 'output window, operand 0, single buffered']
    #allocation4 [shape = 's32[1]{0}', space=sflag, size = 0x4, scoped, tag = 'scoped memory for mlp_forward.1']
    %10 = vsyncpa [#allocation4], 0
    // Predicated region
    $region2: #{mlp_forward.1} parent=1 // pred_check
      _
    $region3: #{mlp_forward.1} parent=1 // pred_check_branch
      %12 = sbr.rel (0) target = $region5
    $region4: #{mlp_forward.1} parent=1 // pred_region
      _
    $region5: #{mlp_forward.1} parent=1 // pred_fallthru
      _
    // Predicated region
    $region6: #{mlp_forward.1} parent=1 // pred_check
      _
    $region7: #{mlp_forward.1} parent=1 // pred_check_branch
      %14 = sbr.rel (0) target = $region9
    $region8: #{mlp_forward.1} parent=1 // pred_region
      _
    $region9: #{mlp_forward.1} parent=1 // pred_fallthru
      _
    // Predicated region
    $region10: #{mlp_forward.1} parent=1 // pred_check
      _
    $region11: #{mlp_forward.1} parent=1 // pred_check_branch
      %16 = sbr.rel (0) target = $region13
    $region12: #{mlp_forward.1} parent=1 // pred_region
      _
    $region13: #{mlp_forward.1} parent=1 // pred_fallthru
      _
    // Predicated region
    $region14: #{mlp_forward.1} parent=1 // pred_check
      _
    $region15: #{mlp_forward.1} parent=1 // pred_check_branch
      %18 = sbr.rel (0) target = $region17
    $region16: #{mlp_forward.1} parent=1 // pred_region
      _
    $region17: #{mlp_forward.1} parent=1 // pred_fallthru
      _
    // Predicated region
    $region18: #{mlp_forward.1} parent=1 // pred_check
      _
    $region19: #{mlp_forward.1} parent=1 // pred_check_branch
      %20 = sbr.rel (0) target = $region21
    $region20: #{mlp_forward.1} parent=1 // pred_region
      _
    $region21: #{mlp_forward.1} parent=1 // pred_fallthru
      _
    %p21 = scmp.eq.s32.totalorder 0, 0
    // Predicated region
    $region22: #{mlp_forward.1} parent=1 // pred_check
      %p22 = pneg %p21
    $region23: #{mlp_forward.1} parent=1 // pred_check_branch
      %24 = sbr.rel (%p22) target = $region25
    $region24: #{mlp_forward.1} parent=1 // pred_region
      %v25 = vld [vmem:[%s4] sm:$0x1]
      %v27 = vlaneseq
      %v28 = vshrl.u32 %v27, 7
      %v29 = vsub.s32 0, %v28
      %v30 = vrot.slane %v25, %v29
      %vm32 = vcmask 261120
      %33 = vst.msk [vmem:[#allocation2] sm:$0xff] %vm32, %v30
      %34 = vst.msk [vmem:[#allocation2 + $0x8] sm:$0xff] %vm32, %v30
    $region25: #{mlp_forward.1} parent=1 // pred_fallthru
      _
    %v35 = vld [vmem:[%s0] sm:$0xff]
    %v36 = vld [vmem:[%s0 + $0x8] sm:$0xff]
    %v37 = vld [vmem:[%s1] sm:$0xff]
    %v38 = vld [vmem:[%s1 + $0x8] sm:$0xff]
    %v39 = vld [vmem:[%s1 + $0x10] sm:$0xff]
    %v40 = vld [vmem:[%s1 + $0x18] sm:$0xff]
    %v41 = vld [vmem:[%s2] sm:$0x1]
    %v43 = vlaneseq
    %v44 = vshrl.u32 %v43, 7
    %v45 = vsub.s32 0, %v44
    %v46 = vrot.slane %v41, %v45
    %vm48 = vcmask 261120
    %v50 = vsel %vm48, %v35, 0
    %v53 = vsel %vm48, %v36, 0
    %55 = vmatprep.subr.mxu0 0.0
    %56 = vmatpush1.msra.mxu0 %v37
    %57 = vmatprep.subr.mxu0 0.0
    %58 = vmatpush1.msra.mxu0 %v38
    %59 = vmatprep.subr.mxu0 0.0
    %60 = vmatpush1.msra.mxu0 %v39
    %61 = vmatprep.subr.mxu0 0.0
    %62 = vmatpush1.msra.mxu0 %v40
    %63 = vmatprep.subr.mxu0 0.0
    %64 = vmatpush1.msra.mxu0 0.0
    %65 = vmatprep.subr.mxu0 0.0
    %66 = vmatpush1.msra.mxu0 0.0
    %67 = vmatprep.subr.mxu0 0.0
    %68 = vmatpush1.msra.mxu0 0.0
    %69 = vmatprep.subr.mxu0 0.0
    %70 = vmatpush1.msra.mxu0 0.0
    %71 = vmatprep.subr.mxu0 0.0
    %72 = vmatpush1.msra.mxu0 0.0
    %73 = vmatprep.subr.mxu0 0.0
    %74 = vmatpush1.msra.mxu0 0.0
    %75 = vmatprep.subr.mxu0 0.0
    %76 = vmatpush1.msra.mxu0 0.0
    %77 = vmatprep.subr.mxu0 0.0
    %78 = vmatpush1.msra.mxu0 0.0
    %79 = vmatprep.subr.mxu0 0.0
    %80 = vmatpush1.msra.mxu0 0.0
    %81 = vmatprep.subr.mxu0 0.0
    %82 = vmatpush1.msra.mxu0 0.0
    %83 = vmatprep.subr.mxu0 0.0
    %84 = vmatpush1.msra.mxu0 0.0
    %85 = vmatprep.subr.mxu0 0.0
    %86 = vmatpush1.msra.mxu0 0.0
    %87 = vmatprep.subr.mxu0 0.0
    %88 = vmatpush1.msra.mxu0 0.0
    %89 = vmatprep.subr.mxu0 0.0
    %90 = vmatpush1.msra.mxu0 0.0
    %91 = vmatprep.subr.mxu0 0.0
    %92 = vmatpush1.msra.mxu0 0.0
    %93 = vmatprep.subr.mxu0 0.0
    %94 = vmatpush1.msra.mxu0 0.0
    %95 = vmatprep.subr.mxu0 0.0
    %96 = vmatpush1.msra.mxu0 0.0
    %97 = vmatprep.subr.mxu0 0.0
    %98 = vmatpush1.msra.mxu0 0.0
    %99 = vmatprep.subr.mxu0 0.0
    %100 = vmatpush1.msra.mxu0 0.0
    %101 = vmatprep.subr.mxu0 0.0
    %102 = vmatpush1.msra.mxu0 0.0
    %103 = vmatprep.subr.mxu0 0.0
    %104 = vmatpush1.msra.mxu0 0.0
    %105 = vmatprep.subr.mxu0 0.0
    %106 = vmatpush1.msra.mxu0 0.0
    %107 = vmatprep.subr.mxu0 0.0
    %108 = vmatpush1.msra.mxu0 0.0
    %109 = vmatprep.subr.mxu0 0.0
    %110 = vmatpush1.msra.mxu0 0.0
    %111 = vmatprep.subr.mxu0 0.0
    %112 = vmatpush1.msra.mxu0 0.0
    %113 = vmatprep.subr.mxu0 0.0
    %114 = vmatpush1.msra.mxu0 0.0
    %115 = vmatprep.subr.mxu0 0.0
    %116 = vmatpush1.msra.mxu0 0.0
    %117 = vmatprep.subr.mxu0 0.0
    %118 = vmatpush1.msra.mxu0 0.0
    %119 = vmatprep.mubr.f32.mxu0 0.0
    %120 = vmatmul.mubr.f32.gmra.mrb[0].mxu0 %v50
    %v121 = vpop.f32.mrb[0].mxu0
    %v122 = vadd.f32 %v46, %v121
    %v123 = vpop.f32.mrb[0].mxu0
    %124 = vmatprep.mubr.f32.mxu0 0.0
    %125 = vmatmul.mubr.f32.gmra.mrb[0].mxu0 %v53
    %v126 = vpop.f32.mrb[0].mxu0
    %v127 = vadd.f32 %v46, %v126
    %v128 = vpop.f32.mrb[0].mxu0
    %129 = vdwg.mxu0
    %v130 = vmul.f32 %v122, 0.5
    %v131 = vmul.f32 %v127, 0.5
    %v132 = vmul.f32 %v122, 0.044715
    %v133 = vmul.f32 %v127, 0.044715
    %v134 = vmul.f32 %v132, %v122
    %v135 = vmul.f32 %v133, %v127
    %v136 = vmul.f32 %v134, %v122
    %v137 = vmul.f32 %v135, %v127
    %v138 = vadd.f32 %v122, %v136
    %v139 = vadd.f32 %v127, %v137
    %v140 = vmul.f32 %v138, 0.7978846
    %v141 = vmul.f32 %v139, 0.7978846
    %v142 = vtanh.pop %v140
    %v143 = vtanh.pop %v141
    %v144 = vadd.f32 %v142, 1.0
    %v145 = vadd.f32 %v143, 1.0
    %v146 = vmul.f32 %v130, %v144
    %v147 = vmul.f32 %v131, %v145
    %v148 = vld [vmem:[#allocation2] sm:$0xff]
    %v149 = vld [vmem:[#allocation2 + $0x8] sm:$0xff]
    %v150 = vld [vmem:[%s3] sm:$0xff]
    %v151 = vld [vmem:[%s3 + $0x8] sm:$0xff]
    %v152 = vld [vmem:[%s3 + $0x10] sm:$0xff]
    %v153 = vld [vmem:[%s3 + $0x18] sm:$0xff]
    %v154 = vld [vmem:[%s3 + $0x20] sm:$0xff]
    %v155 = vld [vmem:[%s3 + $0x28] sm:$0xff]
    %v156 = vld [vmem:[%s3 + $0x30] sm:$0xff]
    %v157 = vld [vmem:[%s3 + $0x38] sm:$0xff]
    %v158 = vld [vmem:[%s3 + $0x40] sm:$0xff]
    %v159 = vld [vmem:[%s3 + $0x48] sm:$0xff]
    %v160 = vld [vmem:[%s3 + $0x50] sm:$0xff]
    %v161 = vld [vmem:[%s3 + $0x58] sm:$0xff]
    %v162 = vld [vmem:[%s3 + $0x60] sm:$0xff]
    %v163 = vld [vmem:[%s3 + $0x68] sm:$0xff]
    %v164 = vld [vmem:[%s3 + $0x70] sm:$0xff]
    %v165 = vld [vmem:[%s3 + $0x78] sm:$0xff]
    %166 = vmatprep.subr.mxu0 0.0
    %167 = vmatpush1.msra.mxu0 %v150
    %168 = vmatprep.subr.mxu0 0.0
    %169 = vmatpush1.msra.mxu0 %v151
    %170 = vmatprep.subr.mxu0 0.0
    %171 = vmatpush1.msra.mxu0 %v152
    %172 = vmatprep.subr.mxu0 0.0
    %173 = vmatpush1.msra.mxu0 %v153
    %174 = vmatprep.subr.mxu0 0.0
    %175 = vmatpush1.msra.mxu0 %v154
    %176 = vmatprep.subr.mxu0 0.0
    %177 = vmatpush1.msra.mxu0 %v155
    %178 = vmatprep.subr.mxu0 0.0
    %179 = vmatpush1.msra.mxu0 %v156
    %180 = vmatprep.subr.mxu0 0.0
    %181 = vmatpush1.msra.mxu0 %v157
    %182 = vmatprep.subr.mxu0 0.0
    %183 = vmatpush1.msra.mxu0 %v158
    %184 = vmatprep.subr.mxu0 0.0
    %185 = vmatpush1.msra.mxu0 %v159
    %186 = vmatprep.subr.mxu0 0.0
    %187 = vmatpush1.msra.mxu0 %v160
    %188 = vmatprep.subr.mxu0 0.0
    %189 = vmatpush1.msra.mxu0 %v161
    %190 = vmatprep.subr.mxu0 0.0
    %191 = vmatpush1.msra.mxu0 %v162
    %192 = vmatprep.subr.mxu0 0.0
    %193 = vmatpush1.msra.mxu0 %v163
    %194 = vmatprep.subr.mxu0 0.0
    %195 = vmatpush1.msra.mxu0 %v164
    %196 = vmatprep.subr.mxu0 0.0
    %197 = vmatpush1.msra.mxu0 %v165
    %198 = vmatprep.subr.mxu0 0.0
    %199 = vmatpush1.msra.mxu0 0.0
    %200 = vmatprep.subr.mxu0 0.0
    %201 = vmatpush1.msra.mxu0 0.0
    %202 = vmatprep.subr.mxu0 0.0
    %203 = vmatpush1.msra.mxu0 0.0
    %204 = vmatprep.subr.mxu0 0.0
    %205 = vmatpush1.msra.mxu0 0.0
    %206 = vmatprep.subr.mxu0 0.0
    %207 = vmatpush1.msra.mxu0 0.0
    %208 = vmatprep.subr.mxu0 0.0
    %209 = vmatpush1.msra.mxu0 0.0
    %210 = vmatprep.subr.mxu0 0.0
    %211 = vmatpush1.msra.mxu0 0.0
    %212 = vmatprep.subr.mxu0 0.0
    %213 = vmatpush1.msra.mxu0 0.0
    %214 = vmatprep.subr.mxu0 0.0
    %215 = vmatpush1.msra.mxu0 0.0
    %216 = vmatprep.subr.mxu0 0.0
    %217 = vmatpush1.msra.mxu0 0.0
    %218 = vmatprep.subr.mxu0 0.0
    %219 = vmatpush1.msra.mxu0 0.0
    %220 = vmatprep.subr.mxu0 0.0
    %221 = vmatpush1.msra.mxu0 0.0
    %222 = vmatprep.subr.mxu0 0.0
    %223 = vmatpush1.msra.mxu0 0.0
    %224 = vmatprep.subr.mxu0 0.0
    %225 = vmatpush1.msra.mxu0 0.0
    %226 = vmatprep.subr.mxu0 0.0
    %227 = vmatpush1.msra.mxu0 0.0
    %228 = vmatprep.subr.mxu0 0.0
    %229 = vmatpush1.msra.mxu0 0.0
    %230 = vmatprep.mubr.f32.mxu0 0.0
    %231 = vmatmul.mubr.f32.gmra.mrb[0].mxu0 %v146
    %v232 = vpop.f32.mrb[0].mxu0
    %v233 = vadd.f32 0.0, %v232
    %v234 = vpop.f32.mrb[0].mxu0
    %235 = vmatprep.mubr.f32.mxu0 0.0
    %236 = vmatmul.mubr.f32.gmra.mrb[0].mxu0 %v147
    %v237 = vpop.f32.mrb[0].mxu0
    %v238 = vadd.f32 0.0, %v237
    %v239 = vpop.f32.mrb[0].mxu0
    %240 = vdwg.mxu0
    %v241 = vadd.f32 %v148, %v233
    %v242 = vadd.f32 %v149, %v238
    %243 = vst.msk [vmem:[#allocation2] sm:$0xff] %vm48, %v241
    %244 = vst.msk [vmem:[#allocation2 + $0x8] sm:$0xff] %vm48, %v242
    // Predicated region
    $region26: #{mlp_forward.1} parent=1 // pred_check
      %p245 = pneg %p21
    $region27: #{mlp_forward.1} parent=1 // pred_check_branch
      %247 = sbr.rel (%p245) target = $region29
    $region28: #{mlp_forward.1} parent=1 // pred_region
      %v248 = vld [vmem:[#allocation2] sm:$0xff]
      %v249 = vld [vmem:[#allocation2 + $0x8] sm:$0xff]
      %250 = vst.msk [vmem:[#allocation3] sm:$0xff] %vm48, %v248
      %251 = vst.msk [vmem:[#allocation3 + $0x8] sm:$0xff] %vm48, %v249
    $region29: #{mlp_forward.1} parent=1 // pred_fallthru
      _
    // Predicated region
    $region30: #{mlp_forward.1} parent=1 // pred_check
      _
    $region31: #{mlp_forward.1} parent=1 // pred_check_branch
      %253 = sbr.rel (0) target = $region33
    $region32: #{mlp_forward.1} parent=1 // pred_region
      %s255 = ssub.s32 256, 256
      %256 = vsyncadd [#allocation4], %s255
      %s257 = sshll.u32 [#allocation3], 4
      %s258 = int_to_ptr.vmem [resolvable:$true] %s257
      %263 = dma.vmem_to_hbm [thread:$0]  %s258, 256, %s5, [#allocation4], 128, 128, 8
    $region33: #{mlp_forward.1} parent=1 // pred_fallthru
      _
    // Predicated region
    $region34: #{mlp_forward.1} parent=1 // pred_check
      _
    $region35: #{mlp_forward.1} parent=1 // pred_check_branch
      %265 = sbr.rel (0) target = $region37
    $region36: #{mlp_forward.1} parent=1 // pred_region
      %266 = dma.done [#allocation4], 256
    $region37: #{mlp_forward.1} parent=1 // pred_fallthru
      _
    %267 = vsyncpa [#allocation4], 1

</llo_original>
